<compile_context>
chip_gen: v7x
topology: tpu7x:2x2x1
jax: 0.10.0
libtpu: 0.0.40
codegen_flags: <defaults>
</compile_context>

<pallas_src>
import math

import jax
import jax.numpy as jnp
from jax import lax
from jax.experimental import pallas as pl
from jax.experimental.pallas import tpu as pltpu

C_IN = 32
C_OUT = 6            # 1 (score) + 4 (loc) + 1 (angle)
SCOPE = 512.0


def _head_kernel(x_ref, wt_ref, bt_ref, aff_ref, score_ref, geo_ref):
    # x_ref: (32, TP)  wt_ref: (6, 32)  bt_ref: (6, 1)  aff_ref: (6, 2)
    # score_ref: (1, TP)  geo_ref: (5, TP)
    y = lax.dot_general(
        wt_ref[...], x_ref[...],
        dimension_numbers=(((1,), (0,)), ((), ())),
        preferred_element_type=jnp.float32,
        precision=lax.Precision.HIGHEST)
    y = y + bt_ref[...]                               # lane-broadcast bias

    # sigmoid(y) == 0.5*tanh(0.5*y) + 0.5  (tanh -> EUP slot, frees VALU).
    # The per-channel post-sigmoid affines are folded into one scale/offset:
    #   score =  sigmoid(y)           -> 0.5    * t + 0.5
    #   loc   =  sigmoid(y) * 512     -> 256    * t + 256
    #   angle = (sigmoid(y)-0.5) * pi -> (pi/2) * t + 0
    t = jnp.tanh(0.5 * y)                             # (6, TP)
    aff = aff_ref[...]                                # (6, 2) = [scale, offset]
    out6 = t * aff[:, 0:1] + aff[:, 1:2]              # single affine pass

    score_ref[...] = out6[0:1, :]
    geo_ref[...] = out6[1:6, :]


def _choose_tp(hw, n, *, tp_cap=32768, min_tp=8192, target_blocks=8):
    """Pick a lane-dense pixel tile that divides hw exactly (no pad/slice
    copies).  Prefer >= ~1 MiB input blocks, but keep enough grid blocks that
    a v7x megacore (2 TensorCores) has work on both cores."""
    tp_cap = min(tp_cap, hw)
    if hw <= min_tp or hw % 128 != 0:
        # Small or ragged pixel count: a single full-extent block is legal and
        # avoids any padding round-trip.
        return hw
    divisors = [d for d in range(128, tp_cap + 1, 128) if hw % d == 0]
    if not divisors:
        return hw
    # Largest divisor that is still >= min_tp and leaves >= target_blocks
    # total grid blocks; else the largest leaving >= 2 blocks; else largest.
    for d in sorted(divisors, reverse=True):
        if d >= min_tp and n * (hw // d) >= target_blocks:
            return d
    for d in sorted(divisors, reverse=True):
        if n * (hw // d) >= 2:
            return d
    return divisors[-1]


def east_output_head(x_nchw, w_fused_t, b_fused_t, *, tp=None):
    """x_nchw: (N, 32, H, W) float32 (or bf16).
    w_fused_t: (6, 32) fused conv weights, b_fused_t: (6, 1) fused biases.
    Returns (score (N,1,H,W), geo (N,5,H,W)) in float32."""
    n, c, h, w = x_nchw.shape
    assert c == C_IN
    hw = h * w

    # Pixels-on-lanes view; NCHW is already contiguous this way (no transpose).
    x3 = x_nchw.reshape(n, C_IN, hw)
    itemsize = jnp.dtype(x3.dtype).itemsize

    if tp is None:
        tp = _choose_tp(hw, n)
    else:
        tp = min(tp, hw)
        if hw % tp != 0:
            tp = hw                 # keep exact coverage; avoid padding

    # Pathological case only: ragged pixel count too large for a single block.
    hw_pad = hw
    if 2 * (C_IN * itemsize + C_OUT * 4) * tp > (40 << 20):
        # TODO(synk): replace this pad round-trip with an in-kernel masked tail.
        tp = 32768
        hw_pad = pl.cdiv(hw, tp) * tp
        x3 = jnp.pad(x3, ((0, 0), (0, 0), (0, hw_pad - hw)))

    grid = (n, hw_pad // tp)

    # Scale/offset table for the folded tanh-form affine (see kernel docstring).
    scale = jnp.array([0.5] + [0.5 * SCOPE] * 4 + [math.pi / 2.0], jnp.float32)
    offset = jnp.array([0.5] + [0.5 * SCOPE] * 4 + [0.0], jnp.float32)
    affine = jnp.stack([scale, offset], axis=1)        # (6, 2)

    # Double-buffered I/O footprint -> explicit scoped-VMEM limit (v5e default
    # is only 16 MiB); capped well under v7x's 64 MiB physical VMEM.
    block_bytes = 2 * (C_IN * itemsize + C_OUT * 4) * tp
    vmem_limit = int(min(48 << 20, max(16 << 20, block_bytes + (4 << 20))))

    score, geo = pl.pallas_call(
        _head_kernel,
        out_shape=(
            jax.ShapeDtypeStruct((n, 1, hw_pad), jnp.float32),
            jax.ShapeDtypeStruct((n, C_OUT - 1, hw_pad), jnp.float32),
        ),
        grid_spec=pltpu.PrefetchScalarGridSpec(
            num_scalar_prefetch=0,
            grid=grid,
            in_specs=[
                pl.BlockSpec((None, C_IN, tp), lambda i, j: (i, 0, j)),
                pl.BlockSpec((C_OUT, C_IN), lambda i, j: (0, 0)),
                pl.BlockSpec((C_OUT, 1), lambda i, j: (0, 0)),
                pl.BlockSpec((C_OUT, 2), lambda i, j: (0, 0)),
            ],
            out_specs=[
                pl.BlockSpec((None, 1, tp), lambda i, j: (i, 0, j)),
                pl.BlockSpec((None, C_OUT - 1, tp), lambda i, j: (i, 0, j)),
            ],
        ),
        compiler_params=pltpu.CompilerParams(
            dimension_semantics=("parallel", "parallel"),
            vmem_limit_bytes=vmem_limit),
    )(x3, w_fused_t.astype(x3.dtype), b_fused_t, affine)

    if hw_pad != hw:
        score = score[:, :, :hw]
        geo = geo[:, :, :hw]
    score = score.reshape(n, 1, h, w)
    geo = geo.reshape(n, C_OUT - 1, h, w)
    return score, geo


def init_params(key):
    """Kaiming-normal(fan_out, relu) init for the three 1x1 convs (as in the
    PyTorch module), fused into a single (6, 32) matrix; biases zero."""
    k1, k2, k3 = jax.random.split(key, 3)
    gain = math.sqrt(2.0)  # relu

    def kaiming(k, out_c, in_c):
        fan_out = out_c * 1 * 1
        std = gain / math.sqrt(fan_out)
        # PyTorch conv weight is (out_c, in_c, 1, 1); keep (out_c, in_c) rows.
        return jax.random.normal(k, (out_c, in_c), jnp.float32) * std

    w1 = kaiming(k1, 1, C_IN)   # score
    w2 = kaiming(k2, 4, C_IN)   # loc
    w3 = kaiming(k3, 1, C_IN)   # angle
    w_fused_t = jnp.concatenate([w1, w2, w3], axis=0)   # (6, 32)
    b_fused_t = jnp.zeros((C_OUT, 1), jnp.float32)
    return w_fused_t, b_fused_t


if __name__ == "__main__":
    key = jax.random.PRNGKey(0)
    kx, kp = jax.random.split(key)

    N, H, W = 2, 16, 16
    x = jax.random.normal(kx, (N, C_IN, H, W), jnp.float32)
    w_fused_t, b_fused_t = init_params(kp)

    score, geo = east_output_head(x, w_fused_t, b_fused_t)
    jax.block_until_ready((score, geo))

    # Pure-JAX reference (1x1 conv == channel matmul), computed in NCHW order.
    y = jnp.einsum("oc,ncp->nop", w_fused_t, x.reshape(N, C_IN, H * W),
                   precision=jax.lax.Precision.HIGHEST) + b_fused_t[None]
    s = jax.nn.sigmoid(y)
    ref_score = s[:, 0:1].reshape(N, 1, H, W)
    ref_loc = (s[:, 1:5] * SCOPE).reshape(N, 4, H, W)
    ref_angle = ((s[:, 5:6] - 0.5) * math.pi).reshape(N, 1, H, W)
    ref_geo = jnp.concatenate([ref_loc, ref_angle], axis=1)

    assert score.shape == (N, 1, H, W) and geo.shape == (N, 5, H, W)
    assert jnp.allclose(score, ref_score, atol=1e-4)
    assert jnp.allclose(geo, ref_geo, atol=1e-2)

    print("KERNEL_OK")
</pallas_src>

<mosaic_0001>
module attributes {stable_mosaic.version = 11 : i64} {
  func.func @_head_kernel(%arg0: i32, %arg1: i32, %arg2: memref<1x32x256xf32, #tpu.memory_space<vmem>>, %arg3: memref<6x32xf32, #tpu.memory_space<vmem>>, %arg4: memref<6x1xf32, #tpu.memory_space<vmem>>, %arg5: memref<6x2xf32, #tpu.memory_space<vmem>>, %arg6: memref<1x1x256xf32, #tpu.memory_space<vmem>>, %arg7: memref<1x5x256xf32, #tpu.memory_space<vmem>>) attributes {dimension_semantics = [#tpu.dimension_semantics<parallel>, #tpu.dimension_semantics<parallel>], iteration_bounds = array<i64: 2, 1>, scalar_prefetch = 0 : i64, scratch_operands = 0 : i64, tpu.core_type = #tpu.core_type<tc>, window_params = [{transform_indices = @transform_0, window_bounds = array<i64: 1, 32, 256>}, {pipeline_mode = #tpu.pipeline_mode<synchronous>, transform_indices = @transform_1, window_bounds = array<i64: 6, 32>}, {pipeline_mode = #tpu.pipeline_mode<synchronous>, transform_indices = @transform_2, window_bounds = array<i64: 6, 1>}, {pipeline_mode = #tpu.pipeline_mode<synchronous>, transform_indices = @transform_3, window_bounds = array<i64: 6, 2>}, {transform_indices = @transform_4, window_bounds = array<i64: 1, 1, 256>}, {transform_indices = @transform_5, window_bounds = array<i64: 1, 5, 256>}]} {
    %c0 = arith.constant 0 : index
    %c0_0 = arith.constant 0 : index
    %0 = vector.load %arg3[%c0, %c0_0] : memref<6x32xf32, #tpu.memory_space<vmem>>, vector<6x32xf32>
    %c0_1 = arith.constant 0 : index
    %c0_2 = arith.constant 0 : index
    %c0_3 = arith.constant 0 : index
    %1 = vector.load %arg2[%c0_1, %c0_2, %c0_3] : memref<1x32x256xf32, #tpu.memory_space<vmem>>, vector<1x32x256xf32>
    %2 = vector.shape_cast %1 : vector<1x32x256xf32> to vector<32x256xf32>
    %cst = arith.constant dense<0.000000e+00> : vector<6x256xf32>
    %3 = tpu.matmul %0, %2, %cst {dimension_numbers = #tpu.dot_dimension_numbers<[1], [0], [0], [1], [0, 0, 1, 1], [], []>, precision = #tpu.contract_precision<fp32>} : vector<6x32xf32>, vector<32x256xf32>, vector<6x256xf32> -> vector<6x256xf32>
    %c0_4 = arith.constant 0 : index
    %c0_5 = arith.constant 0 : index
    %4 = vector.load %arg4[%c0_4, %c0_5] : memref<6x1xf32, #tpu.memory_space<vmem>>, vector<6x1xf32>
    %5 = vector.broadcast %4 : vector<6x1xf32> to vector<6x256xf32>
    %6 = arith.addf %3, %5 : vector<6x256xf32>
    %cst_6 = arith.constant 5.000000e-01 : f32
    %7 = vector.broadcast %cst_6 : f32 to vector<6x256xf32>
    %8 = arith.mulf %7, %6 : vector<6x256xf32>
    %9 = math.tanh %8 : vector<6x256xf32>
    %c0_7 = arith.constant 0 : index
    %c0_8 = arith.constant 0 : index
    %10 = vector.load %arg5[%c0_7, %c0_8] : memref<6x2xf32, #tpu.memory_space<vmem>>, vector<6x2xf32>
    %11 = vector.extract_strided_slice %10 {offsets = [0, 0], sizes = [6, 1], strides = [1, 1]} : vector<6x2xf32> to vector<6x1xf32>
    %12 = vector.broadcast %11 : vector<6x1xf32> to vector<6x256xf32>
    %13 = arith.mulf %9, %12 : vector<6x256xf32>
    %14 = vector.extract_strided_slice %10 {offsets = [0, 1], sizes = [6, 1], strides = [1, 1]} : vector<6x2xf32> to vector<6x1xf32>
    %15 = vector.broadcast %14 : vector<6x1xf32> to vector<6x256xf32>
    %16 = arith.addf %13, %15 : vector<6x256xf32>
    %17 = vector.extract_strided_slice %16 {offsets = [0, 0], sizes = [1, 256], strides = [1, 1]} : vector<6x256xf32> to vector<1x256xf32>
    %c0_9 = arith.constant 0 : index
    %c0_10 = arith.constant 0 : index
    %c0_11 = arith.constant 0 : index
    %18 = vector.load %arg6[%c0_9, %c0_10, %c0_11] : memref<1x1x256xf32, #tpu.memory_space<vmem>>, vector<1x1x256xf32>
    %19 = vector.shape_cast %18 : vector<1x1x256xf32> to vector<1x256xf32>
    %20 = vector.shape_cast %17 : vector<1x256xf32> to vector<1x1x256xf32>
    tpu.vector_store %arg6[%c0_9, %c0_10, %c0_11], %20 {strides = array<i32>} : memref<1x1x256xf32, #tpu.memory_space<vmem>>, vector<1x1x256xf32>,
    %21 = vector.extract_strided_slice %16 {offsets = [1, 0], sizes = [5, 256], strides = [1, 1]} : vector<6x256xf32> to vector<5x256xf32>
    %c0_12 = arith.constant 0 : index
    %c0_13 = arith.constant 0 : index
    %c0_14 = arith.constant 0 : index
    %22 = vector.load %arg7[%c0_12, %c0_13, %c0_14] : memref<1x5x256xf32, #tpu.memory_space<vmem>>, vector<1x5x256xf32>
    %23 = vector.shape_cast %22 : vector<1x5x256xf32> to vector<5x256xf32>
    %24 = vector.shape_cast %21 : vector<5x256xf32> to vector<1x5x256xf32>
    tpu.vector_store %arg7[%c0_12, %c0_13, %c0_14], %24 {strides = array<i32>} : memref<1x5x256xf32, #tpu.memory_space<vmem>>, vector<1x5x256xf32>,
    return
  }
  func.func @transform_0(%arg0: i32, %arg1: i32) -> (i32, i32, i32) {
    %c0_i32 = arith.constant 0 : i32
    %c0_i32_0 = arith.constant 0 : i32
    return %arg0, %c0_i32, %arg1 : i32, i32, i32
  }
  func.func @transform_1(%arg0: i32, %arg1: i32) -> (i32, i32) {
    %c0_i32 = arith.constant 0 : i32
    %c0_i32_0 = arith.constant 0 : i32
    %c0_i32_1 = arith.constant 0 : i32
    return %c0_i32, %c0_i32_0 : i32, i32
  }
  func.func @transform_2(%arg0: i32, %arg1: i32) -> (i32, i32) {
    %c0_i32 = arith.constant 0 : i32
    %c0_i32_0 = arith.constant 0 : i32
    %c0_i32_1 = arith.constant 0 : i32
    return %c0_i32, %c0_i32_0 : i32, i32
  }
  func.func @transform_3(%arg0: i32, %arg1: i32) -> (i32, i32) {
    %c0_i32 = arith.constant 0 : i32
    %c0_i32_0 = arith.constant 0 : i32
    %c0_i32_1 = arith.constant 0 : i32
    return %c0_i32, %c0_i32_0 : i32, i32
  }
  func.func @transform_4(%arg0: i32, %arg1: i32) -> (i32, i32, i32) {
    %c0_i32 = arith.constant 0 : i32
    %c0_i32_0 = arith.constant 0 : i32
    return %arg0, %c0_i32, %arg1 : i32, i32, i32
  }
  func.func @transform_5(%arg0: i32, %arg1: i32) -> (i32, i32, i32) {
    %c0_i32 = arith.constant 0 : i32
    %c0_i32_0 = arith.constant 0 : i32
    return %arg0, %c0_i32, %arg1 : i32, i32, i32
  }
}

</mosaic_0001>

<llo_original>
// kernel: tpu_custom_call.1
$region0: #{tpu_custom_call.1}
  #allocation0 [shape = 'u32[]', space=smem, size = 0x4, offset = 0x4, fixed_abs, tag = 'smem constant byte address 0x4 - core index']
  #allocation1 [shape = 'u32[144,128]{1,0:T(1,128)}', space=vmem, size = 0x12000, scoped, tag = 'internal scratch']
  %s0 = inlined_call_operand.hbm [shape: f32[2,32,256], index: 0, kind: input, shape index: {}]
  %s1 = inlined_call_operand.vmem [shape: f32[6,32], index: 1, kind: input, shape index: {}]
  %s2 = inlined_call_operand.vmem [shape: f32[6,1], index: 2, kind: input, shape index: {}]
  %s3 = inlined_call_operand.vmem [shape: f32[6,2], index: 3, kind: input, shape index: {}]
  %s4 = inlined_call_operand.hbm [shape: f32[2,1,256], index: 4, kind: output, shape index: {0}]
  %s5 = inlined_call_operand.vmem [shape: f32[2,5,256], index: 5, kind: output, shape index: {1}]
  %6 = xla_tuple %s4, %s5
  %s7 = sld [smem:[#allocation0]]
  $region61: #{tpu_custom_call.1} parent=0
    _
  %s9 = ssub.s32 1, %s7
  %s10 = scalar_select 0, %s9, %s7
  $region1: #{tpu_custom_call.1} parent=0
    #allocation2 [shape = 'u8[65536]{0}', space=vmem, size = 0x10000, scoped, tag = 'input window, operand 0']
    #allocation3 [shape = 's32[2]{0}', space=sflag, size = 0x8, scoped, tag = 'scoped memory for tpu_custom_call.1']
    #allocation4 [shape = 's32[2]{0}', space=sflag, size = 0x8, scoped, tag = 'scoped memory for tpu_custom_call.1']
    #allocation5 [shape = 'u8[2048]{0}', space=vmem, size = 0x800, scoped, tag = 'output window, operand 0']
    %11 = vsyncpa [#allocation3], 0
    %s12 = scalar_lea.sflag [#allocation3], 1
    %13 = vsyncpa %s12, 0
    %14 = vsyncpa [#allocation4], 0
    %s15 = scalar_lea.sflag [#allocation4], 1
    %16 = vsyncpa %s15, 0
    loop: start=0, step=1, limit=4
    $region2: #{tpu_custom_call.1} parent=1 // loop_pre_header
      _
    $region3: #{tpu_custom_call.1} parent=1 // loop_header
      %s18 = sphi 0, %s22
      %p19 = scmp.ge.s32.totalorder %s18, 4
      %s25 = sphi 0, %s37
      %s26 = sphi 0, %s33
      %s27 = sphi 0, %s25
      %s28 = sphi 0, %s26
      %s29 = sphi 0, %s27
      %s30 = sphi 0, %s28
      %s42 = sphi 0, %s44
      %s45 = sphi 0, %s42
      %s46 = sphi 0, %s45
      %s62 = sphi 0, %s46
      %s66 = sphi 0, %s66
      %s68 = sphi 0, %s66
      %s69 = sphi 0, %s68
      %s83 = sphi 0, %s69
      %s87 = sphi 0, %s87
      %s89 = sphi 0, %s87
      %s90 = sphi 0, %s89
      %s104 = sphi 0, %s90
      %s108 = sphi 0, %s108
      %s110 = sphi 0, %s108
      %s111 = sphi 0, %s110
      %s125 = sphi 0, %s111
      %s133 = sphi 0, %s135
      %s136 = sphi 0, %s133
      %s137 = sphi 0, %s136
      %s153 = sphi 0, %s137
      %s161 = sphi 0, %s163
      %s164 = sphi 0, %s161
      %s165 = sphi 0, %s164
      %s181 = sphi 0, %s165
    $region4: #{tpu_custom_call.1} parent=1 // loop_header_branch
      %21 = sbr.rel (%p19) target = $region8
    $region5: #{tpu_custom_call.1} parent=1 // loop_body
      %s23 = ssub.s32 %s18, 1
      %s24 = ssub.s32 %s18, 2
      %s31 = sadd.s32 1, %s26
      %p32 = scmp.ge.s32.totalorder %s31, 1
      %s33 = scalar_select %p32, 0, %s31
      %s34 = sadd.s32 1, %s25
      %s35 = scalar_select %p32, %s34, %s25
      %p36 = scmp.ge.s32.totalorder %s35, 2
      %s37 = scalar_select %p36, 0, %s35
      %s38 = ssub.s32 %s25, %s37
      %s39 = ssub.s32 %s26, %s33
      %s40 = sor.u32 %s38, %s39
      %p41 = scmp.eq.s32.totalorder %s40, 0
      %s43 = sadd.s32 %s42, 1
      %s44 = scalar_select %p41, %s42, %s43
      %p47 = pneg %p41
      %p48 = scmp.eq.s32.totalorder %s18, 1
      %p49 = por %p47, %p48
      %p50 = scmp.ne.s32.totalorder %s42, %s45
      %p51 = scmp.eq.s32.totalorder %s18, 0
      %p52 = por %p50, %p51
      %p53 = scmp.ne.s32.totalorder %s42, %s45
      %p54 = scmp.eq.s32.totalorder %s23, 1
      %p55 = por %p53, %p54
      %p56 = scmp.ne.s32.totalorder %s45, %s46
      %p57 = scmp.eq.s32.totalorder %s23, 0
      %p58 = por %p56, %p57
      %p59 = scmp.ne.s32.totalorder %s45, %s46
      %p60 = scmp.eq.s32.totalorder %s24, 1
      %p61 = por %p59, %p60
      %p63 = scmp.ne.s32.totalorder %s46, %s62
      %p64 = scmp.eq.s32.totalorder %s24, 0
      %p65 = por %p63, %p64
      %s67 = sadd.s32 %s66, 1
      %p70 = scmp.eq.s32.totalorder %s18, 1
      %p71 = scmp.ne.s32.totalorder %s66, %s68
      %p72 = scmp.eq.s32.totalorder %s18, 0
      %p73 = por %p71, %p72
      %p74 = scmp.ne.s32.totalorder %s66, %s68
      %p75 = scmp.eq.s32.totalorder %s23, 1
      %p76 = por %p74, %p75
      %p77 = scmp.ne.s32.totalorder %s68, %s69
      %p78 = scmp.eq.s32.totalorder %s23, 0
      %p79 = por %p77, %p78
      %p80 = scmp.ne.s32.totalorder %s68, %s69
      %p81 = scmp.eq.s32.totalorder %s24, 1
      %p82 = por %p80, %p81
      %p84 = scmp.ne.s32.totalorder %s69, %s83
      %p85 = scmp.eq.s32.totalorder %s24, 0
      %p86 = por %p84, %p85
      %s88 = sadd.s32 %s87, 1
      %p91 = scmp.eq.s32.totalorder %s18, 1
      %p92 = scmp.ne.s32.totalorder %s87, %s89
      %p93 = scmp.eq.s32.totalorder %s18, 0
      %p94 = por %p92, %p93
      %p95 = scmp.ne.s32.totalorder %s87, %s89
      %p96 = scmp.eq.s32.totalorder %s23, 1
      %p97 = por %p95, %p96
      %p98 = scmp.ne.s32.totalorder %s89, %s90
      %p99 = scmp.eq.s32.totalorder %s23, 0
      %p100 = por %p98, %p99
      %p101 = scmp.ne.s32.totalorder %s89, %s90
      %p102 = scmp.eq.s32.totalorder %s24, 1
      %p103 = por %p101, %p102
      %p105 = scmp.ne.s32.totalorder %s90, %s104
      %p106 = scmp.eq.s32.totalorder %s24, 0
      %p107 = por %p105, %p106
      %s109 = sadd.s32 %s108, 1
      %p112 = scmp.eq.s32.totalorder %s18, 1
      %p113 = scmp.ne.s32.totalorder %s108, %s110
      %p114 = scmp.eq.s32.totalorder %s18, 0
      %p115 = por %p113, %p114
      %p116 = scmp.ne.s32.totalorder %s108, %s110
      %p117 = scmp.eq.s32.totalorder %s23, 1
      %p118 = por %p116, %p117
      %p119 = scmp.ne.s32.totalorder %s110, %s111
      %p120 = scmp.eq.s32.totalorder %s23, 0
      %p121 = por %p119, %p120
      %p122 = scmp.ne.s32.totalorder %s110, %s111
      %p123 = scmp.eq.s32.totalorder %s24, 1
      %p124 = por %p122, %p123
      %p126 = scmp.ne.s32.totalorder %s111, %s125
      %p127 = scmp.eq.s32.totalorder %s24, 0
      %p128 = por %p126, %p127
      %s129 = ssub.s32 %s25, %s37
      %s130 = ssub.s32 %s26, %s33
      %s131 = sor.u32 %s129, %s130
      %p132 = scmp.eq.s32.totalorder %s131, 0
      %s134 = sadd.s32 %s133, 1
      %s135 = scalar_select %p132, %s133, %s134
      %p138 = pneg %p132
      %p139 = scmp.eq.s32.totalorder %s18, 1
      %p140 = por %p138, %p139
      %p141 = scmp.ne.s32.totalorder %s133, %s136
      %p142 = scmp.eq.s32.totalorder %s18, 0
      %p143 = por %p141, %p142
      %p144 = scmp.ne.s32.totalorder %s133, %s136
      %p145 = scmp.eq.s32.totalorder %s23, 1
      %p146 = por %p144, %p145
      %p147 = scmp.ne.s32.totalorder %s136, %s137
      %p148 = scmp.eq.s32.totalorder %s23, 0
      %p149 = por %p147, %p148
      %p150 = scmp.ne.s32.totalorder %s136, %s137
      %p151 = scmp.eq.s32.totalorder %s24, 1
      %p152 = por %p150, %p151
      %p154 = scmp.ne.s32.totalorder %s137, %s153
      %p155 = scmp.eq.s32.totalorder %s24, 0
      %p156 = por %p154, %p155
      %s157 = ssub.s32 %s25, %s37
      %s158 = ssub.s32 %s26, %s33
      %s159 = sor.u32 %s157, %s158
      %p160 = scmp.eq.s32.totalorder %s159, 0
      %s162 = sadd.s32 %s161, 1
      %s163 = scalar_select %p160, %s161, %s162
      %p166 = pneg %p160
      %p167 = scmp.eq.s32.totalorder %s18, 1
      %p168 = por %p166, %p167
      %p169 = scmp.ne.s32.totalorder %s161, %s164
      %p170 = scmp.eq.s32.totalorder %s18, 0
      %p171 = por %p169, %p170
      %p172 = scmp.ne.s32.totalorder %s161, %s164
      %p173 = scmp.eq.s32.totalorder %s23, 1
      %p174 = por %p172, %p173
      %p175 = scmp.ne.s32.totalorder %s164, %s165
      %p176 = scmp.eq.s32.totalorder %s23, 0
      %p177 = por %p175, %p176
      %p178 = scmp.ne.s32.totalorder %s164, %s165
      %p179 = scmp.eq.s32.totalorder %s24, 1
      %p180 = por %p178, %p179
      %p182 = scmp.ne.s32.totalorder %s165, %s181
      %p183 = scmp.eq.s32.totalorder %s24, 0
      %p184 = por %p182, %p183
      %p185 = scmp.le.s32.totalorder 1, %s18
      %p186 = scmp.lt.s32.totalorder %s18, 3
      %p187 = pnand %p185, %p186
      %p188 = pneg %p187
      // Predicated region
      $region9: #{tpu_custom_call.1} parent=5 // pred_check
        _
      $region10: #{tpu_custom_call.1} parent=5 // pred_check_branch
        %190 = sbr.rel (%p187) target = $region12
      $region11: #{tpu_custom_call.1} parent=5 // pred_region
        %s191 = ssub.s32 %s18, 1
        // Predicated region
        $region13: #{tpu_custom_call.1} parent=11 // pred_check
          %p192 = pneg %p79
        $region14: #{tpu_custom_call.1} parent=11 // pred_check_branch
          %194 = sbr.rel (%p192) target = $region16
        $region15: #{tpu_custom_call.1} parent=11 // pred_region
          _
        $region16: #{tpu_custom_call.1} parent=11 // pred_fallthru
          _
        // Predicated region
        $region17: #{tpu_custom_call.1} parent=11 // pred_check
          %p195 = pneg %p100
        $region18: #{tpu_custom_call.1} parent=11 // pred_check_branch
          %197 = sbr.rel (%p195) target = $region20
        $region19: #{tpu_custom_call.1} parent=11 // pred_region
          _
        $region20: #{tpu_custom_call.1} parent=11 // pred_fallthru
          _
        // Predicated region
        $region21: #{tpu_custom_call.1} parent=11 // pred_check
          %p198 = pneg %p121
        $region22: #{tpu_custom_call.1} parent=11 // pred_check_branch
          %200 = sbr.rel (%p198) target = $region24
        $region23: #{tpu_custom_call.1} parent=11 // pred_region
          _
        $region24: #{tpu_custom_call.1} parent=11 // pred_fallthru
          _
      $region12: #{tpu_custom_call.1} parent=5 // pred_fallthru
        _
      %p201 = scmp.lt.s32.totalorder %s18, 2
      // Predicated region
      $region25: #{tpu_custom_call.1} parent=5 // pred_check
        %p202 = pneg %p201
      $region26: #{tpu_custom_call.1} parent=5 // pred_check_branch
        %204 = sbr.rel (%p202) target = $region28
      $region27: #{tpu_custom_call.1} parent=5 // pred_region
        // Predicated region
        $region29: #{tpu_custom_call.1} parent=27 // pred_check
          %p205 = pneg %p52
        $region30: #{tpu_custom_call.1} parent=27 // pred_check_branch
          %207 = sbr.rel (%p205) target = $region32
        $region31: #{tpu_custom_call.1} parent=27 // pred_region
          %s208 = sand.u32 %s42, 1
          %s209 = scalar_lea.sflag [#allocation3], %s208
          %s210 = sand.u32 %s42, 1
          %s211 = smul.addr %s210, 64
          %s212 = scalar_lea.vmem [#allocation2], %s211
          %s213 = smul.u32 2, %s26
          %s215 = ssub.s32 1024, 1024
          %216 = vsyncadd %s209, %s215
          %s217 = smul.addr %s25, 8
          %s218 = sadd.s32 %s213, %s217
          %s219 = smul.addr %s218, 128
          %s220 = scalar_lea.hbm %s0, %s219
          %s221 = sshll.u32 %s212, 4
          %s222 = int_to_ptr.vmem [resolvable:$true] %s221
          %227 = dma.hbm_to_vmem [thread:$0]  %s220, 1024, %s222, %s209, 256, 256, 16
        $region32: #{tpu_custom_call.1} parent=27 // pred_fallthru
          _
      $region28: #{tpu_custom_call.1} parent=5 // pred_fallthru
        _
      %p228 = scmp.le.s32.totalorder 1, %s18
      %p229 = scmp.lt.s32.totalorder %s18, 3
      %p230 = pnand %p228, %p229
      %p231 = pneg %p230
      // Predicated region
      $region33: #{tpu_custom_call.1} parent=5 // pred_check
        _
      $region34: #{tpu_custom_call.1} parent=5 // pred_check_branch
        %233 = sbr.rel (%p230) target = $region36
      $region35: #{tpu_custom_call.1} parent=5 // pred_region
        %s234 = ssub.s32 %s18, 1
        %s235 = sand.u32 %s45, 1
        %s236 = scalar_lea.sflag [#allocation3], %s235
        %s237 = sand.u32 %s45, 1
        %s238 = smul.addr %s237, 64
        %s239 = scalar_lea.vmem [#allocation2], %s238
        // Predicated region
        $region37: #{tpu_custom_call.1} parent=35 // pred_check
          %p240 = pneg %p58
        $region38: #{tpu_custom_call.1} parent=35 // pred_check_branch
          %242 = sbr.rel (%p240) target = $region40
        $region39: #{tpu_custom_call.1} parent=35 // pred_region
          %243 = dma.done %s236, 1024
        $region40: #{tpu_custom_call.1} parent=35 // pred_fallthru
          _
        %s244 = sand.u32 %s45, 1
        %s245 = scalar_lea.sflag [#allocation3], %s244
        %s246 = sand.u32 %s45, 1
        %s247 = smul.addr %s246, 64
        %s248 = scalar_lea.vmem [#allocation2], %s247
        %p249 = pneg %p58
        %p250 = pneg %p55
        %p251 = pneg %p79
        %p252 = pneg %p76
        %p253 = pneg %p100
        %p254 = pneg %p97
        %p255 = pneg %p121
        %p256 = pneg %p118
        %p257 = pneg %p149
        %p258 = pneg %p146
        %s259 = sand.u32 %s136, 1
        %s260 = scalar_lea.sflag [#allocation4], %s259
        %s261 = sand.u32 %s136, 1
        %s262 = smul.addr %s261, 2
        %s263 = scalar_lea.vmem [#allocation5], %s262
        %p264 = pneg %p177
        %p265 = pneg %p174
        %s266 = smul.u32 2, %s28
        %p267 = scmp.lt.s32.totalorder %s27, 1
        %s268 = scalar_select %p267, %s27, 1
        %p269 = scmp.lt.s32.totalorder %s266, 1
        %s270 = scalar_select %p269, %s266, 1
        %s271 = smul.addr %s268, 2
        %s272 = sadd.s32 %s270, %s271
        %s273 = smul.addr %s272, 8
        %s274 = scalar_lea.vmem %s5, %s273
        %s275 = smul.u32 2, %s28
        %s276 = smul.u32 2, %s28
        %s277 = smul.u32 2, %s28
        %p278 = scmp.lt.s32.totalorder %s27, 1
        %s279 = scalar_select %p278, %s27, 1
        %p280 = scmp.lt.s32.totalorder %s277, 1
        %s281 = scalar_select %p280, %s277, 1
        %s282 = smul.addr %s279, 2
        %s283 = sadd.s32 %s281, %s282
        %s284 = smul.addr %s283, 8
        %s285 = scalar_lea.vmem %s5, %s284
        %s286 = smul.u32 2, %s28
        %v287 = vld [vmem:[%s1] sm:$0x3f]
        %v288 = vld [vmem:[%s239] sm:$0xff]
        %v289 = vld [vmem:[%s239 + $0x8] sm:$0xff]
        %v290 = vld [vmem:[%s239 + $0x10] sm:$0xff]
        %v291 = vld [vmem:[%s239 + $0x18] sm:$0xff]
        %v292 = vld [vmem:[%s239 + $0x20] sm:$0xff]
        %v293 = vld [vmem:[%s239 + $0x28] sm:$0xff]
        %v294 = vld [vmem:[%s239 + $0x30] sm:$0xff]
        %v295 = vld [vmem:[%s239 + $0x38] sm:$0xff]
        %v296 = vld [vmem:[%s2] sm:$0x3f]
        %298 = vset.pattern.permute.xlu0 0
        %299 = vperm.xlu0 %298, %v296
        %v300 = vpop.permute.xlu0 %299
        %vm302 = vcmask 261120
        %v304 = vsel %vm302, %v287, 0
        %v306 = vand.u32 %v289, 4294901760
        %307 = vmatprep.subr.mxu0 %v306
        %v308 = vand.u32 %v288, 4294901760
        %309 = vmatpush1.msra.mxu0 %v308
        %v310 = vand.u32 %v291, 4294901760
        %311 = vmatprep.subr.mxu0 %v310
        %v312 = vand.u32 %v290, 4294901760
        %313 = vmatpush1.msra.mxu0 %v312
        %v314 = vand.u32 %v293, 4294901760
        %315 = vmatprep.subr.mxu0 %v314
        %v316 = vand.u32 %v292, 4294901760
        %317 = vmatpush1.msra.mxu0 %v316
        %v318 = vand.u32 %v295, 4294901760
        %319 = vmatprep.subr.mxu0 %v318
        %v320 = vand.u32 %v294, 4294901760
        %321 = vmatpush1.msra.mxu0 %v320
        %322 = vmatprep.subr.mxu0 0.0
        %323 = vmatpush1.msra.mxu0 0.0
        %324 = vmatprep.subr.mxu0 0.0
        %325 = vmatpush1.msra.mxu0 0.0
        %326 = vmatprep.subr.mxu0 0.0
        %327 = vmatpush1.msra.mxu0 0.0
        %328 = vmatprep.subr.mxu0 0.0
        %329 = vmatpush1.msra.mxu0 0.0
        %330 = vmatprep.subr.mxu0 0.0
        %331 = vmatpush1.msra.mxu0 0.0
        %332 = vmatprep.subr.mxu0 0.0
        %333 = vmatpush1.msra.mxu0 0.0
        %334 = vmatprep.subr.mxu0 0.0
        %335 = vmatpush1.msra.mxu0 0.0
        %336 = vmatprep.subr.mxu0 0.0
        %337 = vmatpush1.msra.mxu0 0.0
        %338 = vmatprep.subr.mxu0 0.0
        %339 = vmatpush1.msra.mxu0 0.0
        %340 = vmatprep.subr.mxu0 0.0
        %341 = vmatpush1.msra.mxu0 0.0
        %342 = vmatprep.subr.mxu0 0.0
        %343 = vmatpush1.msra.mxu0 0.0
        %344 = vmatprep.subr.mxu0 0.0
        %345 = vmatpush1.msra.mxu0 0.0
        %346 = vmatprep.subr.mxu0 0.0
        %347 = vmatpush1.msra.mxu0 0.0
        %348 = vmatprep.subr.mxu0 0.0
        %349 = vmatpush1.msra.mxu0 0.0
        %350 = vmatprep.subr.mxu0 0.0
        %351 = vmatpush1.msra.mxu0 0.0
        %352 = vmatprep.subr.mxu0 0.0
        %353 = vmatpush1.msra.mxu0 0.0
        %354 = vmatprep.subr.mxu0 0.0
        %355 = vmatpush1.msra.mxu0 0.0
        %356 = vmatprep.subr.mxu0 0.0
        %357 = vmatpush1.msra.mxu0 0.0
        %358 = vmatprep.subr.mxu0 0.0
        %359 = vmatpush1.msra.mxu0 0.0
        %360 = vmatprep.subr.mxu0 0.0
        %361 = vmatpush1.msra.mxu0 0.0
        %362 = vmatprep.subr.mxu0 0.0
        %363 = vmatpush1.msra.mxu0 0.0
        %364 = vmatprep.subr.mxu0 0.0
        %365 = vmatpush1.msra.mxu0 0.0
        %366 = vmatprep.subr.mxu0 0.0
        %367 = vmatpush1.msra.mxu0 0.0
        %368 = vmatprep.subr.mxu0 0.0
        %369 = vmatpush1.msra.mxu0 0.0
        %370 = vmatprep.subr.mxu0 0.0
        %371 = vmatpush1.msra.mxu0 0.0
        %372 = vmatprep.subr.mxu0 0.0
        %373 = vmatpush1.msra.mxu0 0.0
        %374 = vmatprep.subr.mxu0 0.0
        %375 = vmatpush1.msra.mxu0 0.0
        %376 = vmatprep.subr.mxu0 0.0
        %377 = vmatpush1.msra.mxu0 0.0
        %378 = vmatprep.mubr.f32.mxu0 0.0
        %v379 = vand.u32 %v304, 4294901760
        %v380 = vsub.f32 %v304, %v379
        %v381 = vand.u32 %v380, 4294901760
        %v382 = vsub.f32 %v380, %v381
        %v383 = vand.u32 %v382, 4294901760
        %384 = vmatmul.mubr.f32.gmra.mrb[0].mxu0 %v383
        %v385 = vpop.f32.mrb[0].mxu0
        %v386 = vadd.f32 %v300, %v385
        %v387 = vpop.f32.mrb[0].mxu0
        %v388 = vadd.f32 %v300, %v387
        %389 = vdwg.mxu0
        %v390 = vand.u32 %v289, 4294901760
        %v391 = vsub.f32 %v289, %v390
        %v392 = vand.u32 %v391, 4294901760
        %v393 = vsub.f32 %v391, %v392
        %v394 = vand.u32 %v393, 4294901760
        %395 = vmatprep.subr.mxu0 %v394
        %v396 = vand.u32 %v288, 4294901760
        %v397 = vsub.f32 %v288, %v396
        %v398 = vand.u32 %v397, 4294901760
        %v399 = vsub.f32 %v397, %v398
        %v400 = vand.u32 %v399, 4294901760
        %401 = vmatpush1.msra.mxu0 %v400
        %v402 = vand.u32 %v291, 4294901760
        %v403 = vsub.f32 %v291, %v402
        %v404 = vand.u32 %v403, 4294901760
        %v405 = vsub.f32 %v403, %v404
        %v406 = vand.u32 %v405, 4294901760
        %407 = vmatprep.subr.mxu0 %v406
        %v408 = vand.u32 %v290, 4294901760
        %v409 = vsub.f32 %v290, %v408
        %v410 = vand.u32 %v409, 4294901760
        %v411 = vsub.f32 %v409, %v410
        %v412 = vand.u32 %v411, 4294901760
        %413 = vmatpush1.msra.mxu0 %v412
        %v414 = vand.u32 %v293, 4294901760
        %v415 = vsub.f32 %v293, %v414
        %v416 = vand.u32 %v415, 4294901760
        %v417 = vsub.f32 %v415, %v416
        %v418 = vand.u32 %v417, 4294901760
        %419 = vmatprep.subr.mxu0 %v418
        %v420 = vand.u32 %v292, 4294901760
        %v421 = vsub.f32 %v292, %v420
        %v422 = vand.u32 %v421, 4294901760
        %v423 = vsub.f32 %v421, %v422
        %v424 = vand.u32 %v423, 4294901760
        %425 = vmatpush1.msra.mxu0 %v424
        %v426 = vand.u32 %v295, 4294901760
        %v427 = vsub.f32 %v295, %v426
        %v428 = vand.u32 %v427, 4294901760
        %v429 = vsub.f32 %v427, %v428
        %v430 = vand.u32 %v429, 4294901760
        %431 = vmatprep.subr.mxu0 %v430
        %v432 = vand.u32 %v294, 4294901760
        %v433 = vsub.f32 %v294, %v432
        %v434 = vand.u32 %v433, 4294901760
        %v435 = vsub.f32 %v433, %v434
        %v436 = vand.u32 %v435, 4294901760
        %437 = vmatpush1.msra.mxu0 %v436
        %438 = vmatprep.subr.mxu0 0.0
        %439 = vmatpush1.msra.mxu0 0.0
        %440 = vmatprep.subr.mxu0 0.0
        %441 = vmatpush1.msra.mxu0 0.0
        %442 = vmatprep.subr.mxu0 0.0
        %443 = vmatpush1.msra.mxu0 0.0
        %444 = vmatprep.subr.mxu0 0.0
        %445 = vmatpush1.msra.mxu0 0.0
        %446 = vmatprep.subr.mxu0 0.0
        %447 = vmatpush1.msra.mxu0 0.0
        %448 = vmatprep.subr.mxu0 0.0
        %449 = vmatpush1.msra.mxu0 0.0
        %450 = vmatprep.subr.mxu0 0.0
        %451 = vmatpush1.msra.mxu0 0.0
        %452 = vmatprep.subr.mxu0 0.0
        %453 = vmatpush1.msra.mxu0 0.0
        %454 = vmatprep.subr.mxu0 0.0
        %455 = vmatpush1.msra.mxu0 0.0
        %456 = vmatprep.subr.mxu0 0.0
        %457 = vmatpush1.msra.mxu0 0.0
        %458 = vmatprep.subr.mxu0 0.0
        %459 = vmatpush1.msra.mxu0 0.0
        %460 = vmatprep.subr.mxu0 0.0
        %461 = vmatpush1.msra.mxu0 0.0
        %462 = vmatprep.subr.mxu0 0.0
        %463 = vmatpush1.msra.mxu0 0.0
        %464 = vmatprep.subr.mxu0 0.0
        %465 = vmatpush1.msra.mxu0 0.0
        %466 = vmatprep.subr.mxu0 0.0
        %467 = vmatpush1.msra.mxu0 0.0
        %468 = vmatprep.subr.mxu0 0.0
        %469 = vmatpush1.msra.mxu0 0.0
        %470 = vmatprep.subr.mxu0 0.0
        %471 = vmatpush1.msra.mxu0 0.0
        %472 = vmatprep.subr.mxu0 0.0
        %473 = vmatpush1.msra.mxu0 0.0
        %474 = vmatprep.subr.mxu0 0.0
        %475 = vmatpush1.msra.mxu0 0.0
        %476 = vmatprep.subr.mxu0 0.0
        %477 = vmatpush1.msra.mxu0 0.0
        %478 = vmatprep.subr.mxu0 0.0
        %479 = vmatpush1.msra.mxu0 0.0
        %480 = vmatprep.subr.mxu0 0.0
        %481 = vmatpush1.msra.mxu0 0.0
        %482 = vmatprep.subr.mxu0 0.0
        %483 = vmatpush1.msra.mxu0 0.0
        %484 = vmatprep.subr.mxu0 0.0
        %485 = vmatpush1.msra.mxu0 0.0
        %486 = vmatprep.subr.mxu0 0.0
        %487 = vmatpush1.msra.mxu0 0.0
        %488 = vmatprep.subr.mxu0 0.0
        %489 = vmatpush1.msra.mxu0 0.0
        %490 = vmatprep.subr.mxu0 0.0
        %491 = vmatpush1.msra.mxu0 0.0
        %492 = vmatprep.subr.mxu0 0.0
        %493 = vmatpush1.msra.mxu0 0.0
        %494 = vmatprep.mubr.f32.mxu0 0.0
        %v495 = vand.u32 %v304, 4294901760
        %496 = vmatmul.mubr.f32.gmra.mrb[0].mxu0 %v495
        %v497 = vpop.f32.mrb[0].mxu0
        %v498 = vadd.f32 %v386, %v497
        %v499 = vpop.f32.mrb[0].mxu0
        %v500 = vadd.f32 %v388, %v499
        %501 = vdwg.mxu0
        %v502 = vand.u32 %v289, 4294901760
        %v503 = vsub.f32 %v289, %v502
        %504 = vmatprep.subr.mxu0 %v503
        %v505 = vand.u32 %v288, 4294901760
        %v506 = vsub.f32 %v288, %v505
        %507 = vmatpush1.msra.mxu0 %v506
        %v508 = vand.u32 %v291, 4294901760
        %v509 = vsub.f32 %v291, %v508
        %510 = vmatprep.subr.mxu0 %v509
        %v511 = vand.u32 %v290, 4294901760
        %v512 = vsub.f32 %v290, %v511
        %513 = vmatpush1.msra.mxu0 %v512
        %v514 = vand.u32 %v293, 4294901760
        %v515 = vsub.f32 %v293, %v514
        %516 = vmatprep.subr.mxu0 %v515
        %v517 = vand.u32 %v292, 4294901760
        %v518 = vsub.f32 %v292, %v517
        %519 = vmatpush1.msra.mxu0 %v518
        %v520 = vand.u32 %v295, 4294901760
        %v521 = vsub.f32 %v295, %v520
        %522 = vmatprep.subr.mxu0 %v521
        %v523 = vand.u32 %v294, 4294901760
        %v524 = vsub.f32 %v294, %v523
        %525 = vmatpush1.msra.mxu0 %v524
        %526 = vmatprep.subr.mxu0 0.0
        %527 = vmatpush1.msra.mxu0 0.0
        %528 = vmatprep.subr.mxu0 0.0
        %529 = vmatpush1.msra.mxu0 0.0
        %530 = vmatprep.subr.mxu0 0.0
        %531 = vmatpush1.msra.mxu0 0.0
        %532 = vmatprep.subr.mxu0 0.0
        %533 = vmatpush1.msra.mxu0 0.0
        %534 = vmatprep.subr.mxu0 0.0
        %535 = vmatpush1.msra.mxu0 0.0
        %536 = vmatprep.subr.mxu0 0.0
        %537 = vmatpush1.msra.mxu0 0.0
        %538 = vmatprep.subr.mxu0 0.0
        %539 = vmatpush1.msra.mxu0 0.0
        %540 = vmatprep.subr.mxu0 0.0
        %541 = vmatpush1.msra.mxu0 0.0
        %542 = vmatprep.subr.mxu0 0.0
        %543 = vmatpush1.msra.mxu0 0.0
        %544 = vmatprep.subr.mxu0 0.0
        %545 = vmatpush1.msra.mxu0 0.0
        %546 = vmatprep.subr.mxu0 0.0
        %547 = vmatpush1.msra.mxu0 0.0
        %548 = vmatprep.subr.mxu0 0.0
        %549 = vmatpush1.msra.mxu0 0.0
        %550 = vmatprep.subr.mxu0 0.0
        %551 = vmatpush1.msra.mxu0 0.0
        %552 = vmatprep.subr.mxu0 0.0
        %553 = vmatpush1.msra.mxu0 0.0
        %554 = vmatprep.subr.mxu0 0.0
        %555 = vmatpush1.msra.mxu0 0.0
        %556 = vmatprep.subr.mxu0 0.0
        %557 = vmatpush1.msra.mxu0 0.0
        %558 = vmatprep.subr.mxu0 0.0
        %559 = vmatpush1.msra.mxu0 0.0
        %560 = vmatprep.subr.mxu0 0.0
        %561 = vmatpush1.msra.mxu0 0.0
        %562 = vmatprep.subr.mxu0 0.0
        %563 = vmatpush1.msra.mxu0 0.0
        %564 = vmatprep.subr.mxu0 0.0
        %565 = vmatpush1.msra.mxu0 0.0
        %566 = vmatprep.subr.mxu0 0.0
        %567 = vmatpush1.msra.mxu0 0.0
        %568 = vmatprep.subr.mxu0 0.0
        %569 = vmatpush1.msra.mxu0 0.0
        %570 = vmatprep.subr.mxu0 0.0
        %571 = vmatpush1.msra.mxu0 0.0
        %572 = vmatprep.subr.mxu0 0.0
        %573 = vmatpush1.msra.mxu0 0.0
        %574 = vmatprep.subr.mxu0 0.0
        %575 = vmatpush1.msra.mxu0 0.0
        %576 = vmatprep.subr.mxu0 0.0
        %577 = vmatpush1.msra.mxu0 0.0
        %578 = vmatprep.subr.mxu0 0.0
        %579 = vmatpush1.msra.mxu0 0.0
        %580 = vmatprep.subr.mxu0 0.0
        %581 = vmatpush1.msra.mxu0 0.0
        %582 = vmatprep.mubr.f32.mxu0 0.0
        %v583 = vand.u32 %v304, 4294901760
        %v584 = vsub.f32 %v304, %v583
        %585 = vmatmul.mubr.f32.gmra.mrb[0].mxu0 %v584
        %v586 = vpop.f32.mrb[0].mxu0
        %v587 = vadd.f32 %v498, %v586
        %v588 = vpop.f32.mrb[0].mxu0
        %v589 = vadd.f32 %v500, %v588
        %590 = vdwg.mxu0
        %v591 = vand.u32 %v289, 4294901760
        %592 = vmatprep.subr.mxu0 %v591
        %v593 = vand.u32 %v288, 4294901760
        %594 = vmatpush1.msra.mxu0 %v593
        %v595 = vand.u32 %v291, 4294901760
        %596 = vmatprep.subr.mxu0 %v595
        %v597 = vand.u32 %v290, 4294901760
        %598 = vmatpush1.msra.mxu0 %v597
        %v599 = vand.u32 %v293, 4294901760
        %600 = vmatprep.subr.mxu0 %v599
        %v601 = vand.u32 %v292, 4294901760
        %602 = vmatpush1.msra.mxu0 %v601
        %v603 = vand.u32 %v295, 4294901760
        %604 = vmatprep.subr.mxu0 %v603
        %v605 = vand.u32 %v294, 4294901760
        %606 = vmatpush1.msra.mxu0 %v605
        %607 = vmatprep.subr.mxu0 0.0
        %608 = vmatpush1.msra.mxu0 0.0
        %609 = vmatprep.subr.mxu0 0.0
        %610 = vmatpush1.msra.mxu0 0.0
        %611 = vmatprep.subr.mxu0 0.0
        %612 = vmatpush1.msra.mxu0 0.0
        %613 = vmatprep.subr.mxu0 0.0
        %614 = vmatpush1.msra.mxu0 0.0
        %615 = vmatprep.subr.mxu0 0.0
        %616 = vmatpush1.msra.mxu0 0.0
        %617 = vmatprep.subr.mxu0 0.0
        %618 = vmatpush1.msra.mxu0 0.0
        %619 = vmatprep.subr.mxu0 0.0
        %620 = vmatpush1.msra.mxu0 0.0
        %621 = vmatprep.subr.mxu0 0.0
        %622 = vmatpush1.msra.mxu0 0.0
        %623 = vmatprep.subr.mxu0 0.0
        %624 = vmatpush1.msra.mxu0 0.0
        %625 = vmatprep.subr.mxu0 0.0
        %626 = vmatpush1.msra.mxu0 0.0
        %627 = vmatprep.subr.mxu0 0.0
        %628 = vmatpush1.msra.mxu0 0.0
        %629 = vmatprep.subr.mxu0 0.0
        %630 = vmatpush1.msra.mxu0 0.0
        %631 = vmatprep.subr.mxu0 0.0
        %632 = vmatpush1.msra.mxu0 0.0
        %633 = vmatprep.subr.mxu0 0.0
        %634 = vmatpush1.msra.mxu0 0.0
        %635 = vmatprep.subr.mxu0 0.0
        %636 = vmatpush1.msra.mxu0 0.0
        %637 = vmatprep.subr.mxu0 0.0
        %638 = vmatpush1.msra.mxu0 0.0
        %639 = vmatprep.subr.mxu0 0.0
        %640 = vmatpush1.msra.mxu0 0.0
        %641 = vmatprep.subr.mxu0 0.0
        %642 = vmatpush1.msra.mxu0 0.0
        %643 = vmatprep.subr.mxu0 0.0
        %644 = vmatpush1.msra.mxu0 0.0
        %645 = vmatprep.subr.mxu0 0.0
        %646 = vmatpush1.msra.mxu0 0.0
        %647 = vmatprep.subr.mxu0 0.0
        %648 = vmatpush1.msra.mxu0 0.0
        %649 = vmatprep.subr.mxu0 0.0
        %650 = vmatpush1.msra.mxu0 0.0
        %651 = vmatprep.subr.mxu0 0.0
        %652 = vmatpush1.msra.mxu0 0.0
        %653 = vmatprep.subr.mxu0 0.0
        %654 = vmatpush1.msra.mxu0 0.0
        %655 = vmatprep.subr.mxu0 0.0
        %656 = vmatpush1.msra.mxu0 0.0
        %657 = vmatprep.subr.mxu0 0.0
        %658 = vmatpush1.msra.mxu0 0.0
        %659 = vmatprep.subr.mxu0 0.0
        %660 = vmatpush1.msra.mxu0 0.0
        %661 = vmatprep.subr.mxu0 0.0
        %662 = vmatpush1.msra.mxu0 0.0
        %663 = vmatprep.mubr.f32.mxu0 0.0
        %v664 = vand.u32 %v304, 4294901760
        %v665 = vsub.f32 %v304, %v664
        %v666 = vand.u32 %v665, 4294901760
        %667 = vmatmul.mubr.f32.gmra.mrb[0].mxu0 %v666
        %v668 = vpop.f32.mrb[0].mxu0
        %v669 = vadd.f32 %v587, %v668
        %v670 = vpop.f32.mrb[0].mxu0
        %v671 = vadd.f32 %v589, %v670
        %672 = vdwg.mxu0
        %v673 = vand.u32 %v289, 4294901760
        %v674 = vsub.f32 %v289, %v673
        %v675 = vand.u32 %v674, 4294901760
        %676 = vmatprep.subr.mxu0 %v675
        %v677 = vand.u32 %v288, 4294901760
        %v678 = vsub.f32 %v288, %v677
        %v679 = vand.u32 %v678, 4294901760
        %680 = vmatpush1.msra.mxu0 %v679
        %v681 = vand.u32 %v291, 4294901760
        %v682 = vsub.f32 %v291, %v681
        %v683 = vand.u32 %v682, 4294901760
        %684 = vmatprep.subr.mxu0 %v683
        %v685 = vand.u32 %v290, 4294901760
        %v686 = vsub.f32 %v290, %v685
        %v687 = vand.u32 %v686, 4294901760
        %688 = vmatpush1.msra.mxu0 %v687
        %v689 = vand.u32 %v293, 4294901760
        %v690 = vsub.f32 %v293, %v689
        %v691 = vand.u32 %v690, 4294901760
        %692 = vmatprep.subr.mxu0 %v691
        %v693 = vand.u32 %v292, 4294901760
        %v694 = vsub.f32 %v292, %v693
        %v695 = vand.u32 %v694, 4294901760
        %696 = vmatpush1.msra.mxu0 %v695
        %v697 = vand.u32 %v295, 4294901760
        %v698 = vsub.f32 %v295, %v697
        %v699 = vand.u32 %v698, 4294901760
        %700 = vmatprep.subr.mxu0 %v699
        %v701 = vand.u32 %v294, 4294901760
        %v702 = vsub.f32 %v294, %v701
        %v703 = vand.u32 %v702, 4294901760
        %704 = vmatpush1.msra.mxu0 %v703
        %705 = vmatprep.subr.mxu0 0.0
        %706 = vmatpush1.msra.mxu0 0.0
        %707 = vmatprep.subr.mxu0 0.0
        %708 = vmatpush1.msra.mxu0 0.0
        %709 = vmatprep.subr.mxu0 0.0
        %710 = vmatpush1.msra.mxu0 0.0
        %711 = vmatprep.subr.mxu0 0.0
        %712 = vmatpush1.msra.mxu0 0.0
        %713 = vmatprep.subr.mxu0 0.0
        %714 = vmatpush1.msra.mxu0 0.0
        %715 = vmatprep.subr.mxu0 0.0
        %716 = vmatpush1.msra.mxu0 0.0
        %717 = vmatprep.subr.mxu0 0.0
        %718 = vmatpush1.msra.mxu0 0.0
        %719 = vmatprep.subr.mxu0 0.0
        %720 = vmatpush1.msra.mxu0 0.0
        %721 = vmatprep.subr.mxu0 0.0
        %722 = vmatpush1.msra.mxu0 0.0
        %723 = vmatprep.subr.mxu0 0.0
        %724 = vmatpush1.msra.mxu0 0.0
        %725 = vmatprep.subr.mxu0 0.0
        %726 = vmatpush1.msra.mxu0 0.0
        %727 = vmatprep.subr.mxu0 0.0
        %728 = vmatpush1.msra.mxu0 0.0
        %729 = vmatprep.subr.mxu0 0.0
        %730 = vmatpush1.msra.mxu0 0.0
        %731 = vmatprep.subr.mxu0 0.0
        %732 = vmatpush1.msra.mxu0 0.0
        %733 = vmatprep.subr.mxu0 0.0
        %734 = vmatpush1.msra.mxu0 0.0
        %735 = vmatprep.subr.mxu0 0.0
        %736 = vmatpush1.msra.mxu0 0.0
        %737 = vmatprep.subr.mxu0 0.0
        %738 = vmatpush1.msra.mxu0 0.0
        %739 = vmatprep.subr.mxu0 0.0
        %740 = vmatpush1.msra.mxu0 0.0
        %741 = vmatprep.subr.mxu0 0.0
        %742 = vmatpush1.msra.mxu0 0.0
        %743 = vmatprep.subr.mxu0 0.0
        %744 = vmatpush1.msra.mxu0 0.0
        %745 = vmatprep.subr.mxu0 0.0
        %746 = vmatpush1.msra.mxu0 0.0
        %747 = vmatprep.subr.mxu0 0.0
        %748 = vmatpush1.msra.mxu0 0.0
        %749 = vmatprep.subr.mxu0 0.0
        %750 = vmatpush1.msra.mxu0 0.0
        %751 = vmatprep.subr.mxu0 0.0
        %752 = vmatpush1.msra.mxu0 0.0
        %753 = vmatprep.subr.mxu0 0.0
        %754 = vmatpush1.msra.mxu0 0.0
        %755 = vmatprep.subr.mxu0 0.0
        %756 = vmatpush1.msra.mxu0 0.0
        %757 = vmatprep.subr.mxu0 0.0
        %758 = vmatpush1.msra.mxu0 0.0
        %759 = vmatprep.subr.mxu0 0.0
        %760 = vmatpush1.msra.mxu0 0.0
        %761 = vmatprep.mubr.f32.mxu0 0.0
        %v762 = vand.u32 %v304, 4294901760
        %763 = vmatmul.mubr.f32.gmra.mrb[0].mxu0 %v762
        %v764 = vpop.f32.mrb[0].mxu0
        %v765 = vadd.f32 %v669, %v764
        %v766 = vpop.f32.mrb[0].mxu0
        %v767 = vadd.f32 %v671, %v766
        %768 = vdwg.mxu0
        %v769 = vand.u32 %v289, 4294901760
        %770 = vmatprep.subr.mxu0 %v769
        %v771 = vand.u32 %v288, 4294901760
        %772 = vmatpush1.msra.mxu0 %v771
        %v773 = vand.u32 %v291, 4294901760
        %774 = vmatprep.subr.mxu0 %v773
        %v775 = vand.u32 %v290, 4294901760
        %776 = vmatpush1.msra.mxu0 %v775
        %v777 = vand.u32 %v293, 4294901760
        %778 = vmatprep.subr.mxu0 %v777
        %v779 = vand.u32 %v292, 4294901760
        %780 = vmatpush1.msra.mxu0 %v779
        %v781 = vand.u32 %v295, 4294901760
        %782 = vmatprep.subr.mxu0 %v781
        %v783 = vand.u32 %v294, 4294901760
        %784 = vmatpush1.msra.mxu0 %v783
        %785 = vmatprep.subr.mxu0 0.0
        %786 = vmatpush1.msra.mxu0 0.0
        %787 = vmatprep.subr.mxu0 0.0
        %788 = vmatpush1.msra.mxu0 0.0
        %789 = vmatprep.subr.mxu0 0.0
        %790 = vmatpush1.msra.mxu0 0.0
        %791 = vmatprep.subr.mxu0 0.0
        %792 = vmatpush1.msra.mxu0 0.0
        %793 = vmatprep.subr.mxu0 0.0
        %794 = vmatpush1.msra.mxu0 0.0
        %795 = vmatprep.subr.mxu0 0.0
        %796 = vmatpush1.msra.mxu0 0.0
        %797 = vmatprep.subr.mxu0 0.0
        %798 = vmatpush1.msra.mxu0 0.0
        %799 = vmatprep.subr.mxu0 0.0
        %800 = vmatpush1.msra.mxu0 0.0
        %801 = vmatprep.subr.mxu0 0.0
        %802 = vmatpush1.msra.mxu0 0.0
        %803 = vmatprep.subr.mxu0 0.0
        %804 = vmatpush1.msra.mxu0 0.0
        %805 = vmatprep.subr.mxu0 0.0
        %806 = vmatpush1.msra.mxu0 0.0
        %807 = vmatprep.subr.mxu0 0.0
        %808 = vmatpush1.msra.mxu0 0.0
        %809 = vmatprep.subr.mxu0 0.0
        %810 = vmatpush1.msra.mxu0 0.0
        %811 = vmatprep.subr.mxu0 0.0
        %812 = vmatpush1.msra.mxu0 0.0
        %813 = vmatprep.subr.mxu0 0.0
        %814 = vmatpush1.msra.mxu0 0.0
        %815 = vmatprep.subr.mxu0 0.0
        %816 = vmatpush1.msra.mxu0 0.0
        %817 = vmatprep.subr.mxu0 0.0
        %818 = vmatpush1.msra.mxu0 0.0
        %819 = vmatprep.subr.mxu0 0.0
        %820 = vmatpush1.msra.mxu0 0.0
        %821 = vmatprep.subr.mxu0 0.0
        %822 = vmatpush1.msra.mxu0 0.0
        %823 = vmatprep.subr.mxu0 0.0
        %824 = vmatpush1.msra.mxu0 0.0
        %825 = vmatprep.subr.mxu0 0.0
        %826 = vmatpush1.msra.mxu0 0.0
        %827 = vmatprep.subr.mxu0 0.0
        %828 = vmatpush1.msra.mxu0 0.0
        %829 = vmatprep.subr.mxu0 0.0
        %830 = vmatpush1.msra.mxu0 0.0
        %831 = vmatprep.subr.mxu0 0.0
        %832 = vmatpush1.msra.mxu0 0.0
        %833 = vmatprep.subr.mxu0 0.0
        %834 = vmatpush1.msra.mxu0 0.0
        %835 = vmatprep.subr.mxu0 0.0
        %836 = vmatpush1.msra.mxu0 0.0
        %837 = vmatprep.subr.mxu0 0.0
        %838 = vmatpush1.msra.mxu0 0.0
        %839 = vmatprep.subr.mxu0 0.0
        %840 = vmatpush1.msra.mxu0 0.0
        %841 = vmatprep.mubr.f32.mxu0 0.0
        %v842 = vand.u32 %v304, 4294901760
        %843 = vmatmul.mubr.f32.gmra.mrb[0].mxu0 %v842
        %v844 = vpop.f32.mrb[0].mxu0
        %v845 = vadd.f32 %v765, %v844
        %v846 = vpop.f32.mrb[0].mxu0
        %v847 = vadd.f32 %v767, %v846
        %848 = vdwg.mxu0
        %v849 = vmul.f32 %v845, 0.5
        %v850 = vmul.f32 %v847, 0.5
        %v851 = vtanh.pop %v849
        %v852 = vtanh.pop %v850
        %v853 = vld [vmem:[%s3] sm:$0x3f]
        %855 = vset.pattern.permute.xlu0 0
        %856 = vperm.xlu0 %855, %v853
        %v857 = vpop.permute.xlu0 %856
        %v859 = vmul.f32 %v851, %v857
        %v860 = vmul.f32 %v852, %v857
        %861 = vset.pattern.permute.xlu0 1
        %862 = vperm.xlu0 %861, %v853
        %v863 = vpop.permute.xlu0 %862
        %v865 = vadd.f32 %v859, %v863
        %v866 = vadd.f32 %v860, %v863
        %v869 = vcombine.low %v865, %v866
        %v871 = vunpack.c.l.s4 1966171168
        %v872 = vunpack.c.0.s8 %v871
        %v873 = vlaneseq
        %v874 = vshrl.u32 %v873, 7
        %v875 = vsub.s32 %v872, %v874
        %v876 = vrot.slane %v869, %v875
        %v878 = vunpack.c.l.s4 1966171168
        %v879 = vunpack.c.0.s8 %v878
        %v880 = vlaneseq
        %v881 = vshrl.u32 %v880, 7
        %v882 = vsub.s32 %v879, %v881
        %v883 = vrot.slane %v876, %v882
        %v885 = vlaneseq
        %vm886 = vcmp.ge.s32.totalorder %v885, 0
        %vm887 = vcmp.lt.s32.totalorder %v885, 256
        %vm888 = vmand %vm886, %vm887
        %889 = vst.msk [vmem:[%s263] sm:$0x3] %vm888, %v883
        %v890 = vrot.slane %v865, 1
        %v891 = vrot.slane %v866, 1
        %894 = vst [vmem:[%s285] sm:$0x1f] %v890
        %895 = vst [vmem:[%s285 + $0x8] sm:$0x1f] %v891
        %s896 = sand.u32 %s136, 1
        %s897 = scalar_lea.sflag [#allocation4], %s896
        %s898 = sand.u32 %s136, 1
        %s899 = smul.addr %s898, 2
        %s900 = scalar_lea.vmem [#allocation5], %s899
        %s901 = smul.u32 2, %s28
        %p902 = scmp.lt.s32.totalorder %s27, 1
        %s903 = scalar_select %p902, %s27, 1
        %p904 = scmp.lt.s32.totalorder %s901, 1
        %s905 = scalar_select %p904, %s901, 1
        %s906 = smul.addr %s903, 2
        %s907 = sadd.s32 %s905, %s906
        %s908 = smul.addr %s907, 8
        %s909 = scalar_lea.vmem %s5, %s908
        // Predicated region
        $region41: #{tpu_custom_call.1} parent=35 // pred_check
          %p910 = pneg %p146
        $region42: #{tpu_custom_call.1} parent=35 // pred_check_branch
          %912 = sbr.rel (%p910) target = $region44
        $region43: #{tpu_custom_call.1} parent=35 // pred_region
          %s913 = smul.u32 2, %s28
          %s915 = ssub.s32 32, 32
          %916 = vsyncadd %s897, %s915
          %s917 = smul.addr %s27, 2
          %s918 = sadd.s32 %s913, %s917
          %s919 = smul.addr %s918, 16
          %s920 = scalar_lea.hbm %s4, %s919
          %s922 = sshll.u32 %s900, 4
          %s923 = int_to_ptr.vmem [resolvable:$true] %s922
          %925 = dma.vmem_to_hbm [thread:$0]  %s923, 32, %s920, %s897
        $region44: #{tpu_custom_call.1} parent=35 // pred_fallthru
          _
        // Predicated region
        $region45: #{tpu_custom_call.1} parent=35 // pred_check
          %p926 = pneg %p174
        $region46: #{tpu_custom_call.1} parent=35 // pred_check_branch
          %928 = sbr.rel (%p926) target = $region48
        $region47: #{tpu_custom_call.1} parent=35 // pred_region
          %s929 = smul.u32 2, %s28
        $region48: #{tpu_custom_call.1} parent=35 // pred_fallthru
          _
      $region36: #{tpu_custom_call.1} parent=5 // pred_fallthru
        _
      %p930 = scmp.le.s32.totalorder 2, %s18
      // Predicated region
      $region49: #{tpu_custom_call.1} parent=5 // pred_check
        %p931 = pneg %p930
      $region50: #{tpu_custom_call.1} parent=5 // pred_check_branch
        %933 = sbr.rel (%p931) target = $region52
      $region51: #{tpu_custom_call.1} parent=5 // pred_region
        %s934 = ssub.s32 %s18, 2
        // Predicated region
        $region53: #{tpu_custom_call.1} parent=51 // pred_check
          %p935 = pneg %p152
        $region54: #{tpu_custom_call.1} parent=51 // pred_check_branch
          %937 = sbr.rel (%p935) target = $region56
        $region55: #{tpu_custom_call.1} parent=51 // pred_region
          %s938 = sand.u32 %s137, 1
          %s939 = scalar_lea.sflag [#allocation4], %s938
          %s940 = sand.u32 %s137, 1
          %s941 = smul.addr %s940, 2
          %s942 = scalar_lea.vmem [#allocation5], %s941
          %943 = dma.done %s939, 32
        $region56: #{tpu_custom_call.1} parent=51 // pred_fallthru
          _
        // Predicated region
        $region57: #{tpu_custom_call.1} parent=51 // pred_check
          %p944 = pneg %p180
        $region58: #{tpu_custom_call.1} parent=51 // pred_check_branch
          %946 = sbr.rel (%p944) target = $region60
        $region59: #{tpu_custom_call.1} parent=51 // pred_region
          %s947 = smul.u32 2, %s30
          %p948 = scmp.lt.s32.totalorder %s29, 1
          %s949 = scalar_select %p948, %s29, 1
          %p950 = scmp.lt.s32.totalorder %s947, 1
          %s951 = scalar_select %p950, %s947, 1
          %s952 = smul.addr %s949, 2
          %s953 = sadd.s32 %s951, %s952
          %s954 = smul.addr %s953, 8
          %s955 = scalar_lea.vmem %s5, %s954
        $region60: #{tpu_custom_call.1} parent=51 // pred_fallthru
          _
      $region52: #{tpu_custom_call.1} parent=5 // pred_fallthru
        _
    $region6: #{tpu_custom_call.1} parent=1 // loop_footer
      %s22 = sadd.s32 1, %s18
    $region7: #{tpu_custom_call.1} parent=1 // loop_footer_branch
      %17 = sbr.rel target = $region3
    $region8: #{tpu_custom_call.1} parent=1 // loop_exit
      _
    %956 = vsyncpa [#allocation3], 1
    %s957 = scalar_lea.sflag [#allocation3], 1
    %958 = vsyncpa %s957, 1
    %959 = vsyncpa [#allocation4], 1
    %s960 = scalar_lea.sflag [#allocation4], 1
    %961 = vsyncpa %s960, 1

</llo_original>
